<compile_context>
chip_gen: v7x
topology: tpu7x:2x2x1
jax: 0.10.0
libtpu: 0.0.40
codegen_flags: <defaults>
</compile_context>

<pallas_src>
import jax
import jax.numpy as jnp
from jax.experimental import pallas as pl
from jax.experimental.pallas import tpu as pltpu


# --------------------------------------------------------------------------
# Pallas kernels: channels-first per-voxel fusion (+ optional classifier).
# Per grid step:
#   x:  (Cin, tile_v)  bf16, lane-dense
#   wf: (Cf, Cin) bf16   bf: (Cf, 1) f32        (resident)
#   wc: (Np, Cf)  bf16   bc: (Np, 1) f32        (resident, Np = pad(Ncls, 8))
#   out: (Np, tile_v) / (Cf, tile_v) bf16
# --------------------------------------------------------------------------
def _classify_kernel(x_ref, wf_ref, bf_ref, wc_ref, bc_ref, logit_ref):
    fused = (jnp.dot(wf_ref[...], x_ref[...],
                     preferred_element_type=jnp.float32)
             + bf_ref[...])
    # ReLU, then drop to bf16 so the classifier matmul is a single native
    # bf16 MXU pass as well (K=Cf is tiny, rounding ~1e-3 relative).
    fused = jnp.maximum(fused, 0.0).astype(jnp.bfloat16)
    logits = (jnp.dot(wc_ref[...], fused,
                      preferred_element_type=jnp.float32)
              + bc_ref[...])
    logit_ref[...] = logits.astype(logit_ref.dtype)


def _fuse_only_kernel(x_ref, wf_ref, bf_ref, fuse_ref):
    fused = (jnp.dot(wf_ref[...], x_ref[...],
                     preferred_element_type=jnp.float32)
             + bf_ref[...])
    fuse_ref[...] = jnp.maximum(fused, 0.0).astype(fuse_ref.dtype)


def _round_up(x, m):
    return ((x + m - 1) // m) * m


def fuse_and_classify(x_grid, wf, bf, wc, bc, *,
                      classifier_head=True, tile_v=8192):
    """x_grid: (Cin, D, H, W) bf16 — img/pcd grids already concatenated.

    Returns bf16 logits (Ncls, D, H, W) if classifier_head else bf16 fused
    (Cf, D, H, W).  The grid is consumed in its natural (C, V) layout with V
    on the lane axis (no transposes).
    """
    Cin, D, H, W = x_grid.shape
    Cf = wf.shape[1]
    Ncls = wc.shape[1]
    V = D * H * W

    # Free reshape (contiguous channels-first data).
    x = x_grid.reshape(Cin, V).astype(jnp.bfloat16)

    # Tiny resident parameters, pre-transposed once.  bf16 weights keep the
    # MXU at native bf16 rate; f32 biases keep the f32 accumulator exact.
    wf_t = wf.T.astype(jnp.bfloat16)                       # (Cf, Cin)
    bf_c = bf.reshape(Cf, 1).astype(jnp.float32)

    # Lane-axis tiling: multiples of 128, and force >= 2 grid steps whenever
    # V allows so both v7x TensorCores get work.  Per-step VMEM (double-
    # buffered bf16 in/out + f32 fused scratch) is well under 2 MiB even at
    # tile_v=16384, so the default scoped-VMEM limit is fine on v5e/v6e/v7x.
    tile_v = max(128, _round_up(min(tile_v, V), 128))
    if V > 128:
        half = max(128, _round_up(pl.cdiv(V, 2), 128))
        tile_v = min(tile_v, half)                         # -> grid >= 2 steps
    grid = (pl.cdiv(V, tile_v),)
    # TODO(synk): on v7x, pltpu.CORE_PARALLEL (or an explicit core_map split)
    # can be used here to shard the grid axis across the two TensorCores.
    cparams = pltpu.CompilerParams(dimension_semantics=("parallel",))

    x_spec = pl.BlockSpec((Cin, tile_v), lambda i: (0, i))
    fuse_w_specs = [pl.BlockSpec((Cf, Cin), lambda i: (0, 0)),
                    pl.BlockSpec((Cf, 1), lambda i: (0, 0))]

    if classifier_head:
        # Pad the classifier to a full 8-sublane output block (unmasked vst);
        # pad rows are zero and sliced off afterwards.
        Np = _round_up(Ncls, 8)
        wc_t = jnp.zeros((Np, Cf), jnp.bfloat16).at[:Ncls].set(
            wc.T.astype(jnp.bfloat16))
        bc_c = jnp.zeros((Np, 1), jnp.float32).at[:Ncls].set(
            bc.reshape(Ncls, 1).astype(jnp.float32))
        logits = pl.pallas_call(
            _classify_kernel,
            out_shape=jax.ShapeDtypeStruct((Np, V), jnp.bfloat16),
            grid_spec=pltpu.PrefetchScalarGridSpec(
                num_scalar_prefetch=0,
                grid=grid,
                in_specs=[x_spec] + fuse_w_specs + [
                    pl.BlockSpec((Np, Cf), lambda i: (0, 0)),
                    pl.BlockSpec((Np, 1), lambda i: (0, 0)),
                ],
                out_specs=pl.BlockSpec((Np, tile_v), lambda i: (0, i)),
            ),
            compiler_params=cparams,
        )(x, wf_t, bf_c, wc_t, bc_c)
        return logits[:Ncls].reshape(Ncls, D, H, W)

    fused = pl.pallas_call(
        _fuse_only_kernel,
        out_shape=jax.ShapeDtypeStruct((Cf, V), jnp.bfloat16),
        grid_spec=pltpu.PrefetchScalarGridSpec(
            num_scalar_prefetch=0,
            grid=grid,
            in_specs=[x_spec] + fuse_w_specs,
            out_specs=pl.BlockSpec((Cf, tile_v), lambda i: (0, i)),
        ),
        compiler_params=cparams,
    )(x, wf_t, bf_c)
    return fused.reshape(Cf, D, H, W)


# --------------------------------------------------------------------------
# Deterministic stand-ins for submodules whose definitions are not provided.
# They emit bf16 grids directly so the fusion kernel input needs no cast.
# --------------------------------------------------------------------------
def image_feature_extractor_stub(images, intrinsic, rotation, translation,
                                 img_channels, D, H, W, key):
    # TODO(synk): ImageFeatureExtractor (ResNet50) + InversePerspectiveProjection
    # internals not provided in the reference; deterministic stand-in producing
    # the documented [img_channels, D, H, W] grid.
    n_img = images.shape[0]
    cam_feat = images.mean(axis=(2, 3))                       # (N, 3)
    geo = jnp.concatenate([intrinsic.reshape(n_img, -1),
                           rotation.reshape(n_img, -1),
                           translation], axis=1)              # (N, 21)
    feat = jnp.concatenate([cam_feat, geo], axis=1)           # (N, 24)
    w = jax.random.normal(key, (feat.shape[1], img_channels),
                          dtype=jnp.float32) * 0.1
    base = jnp.tanh(feat @ w).mean(axis=0)                    # (Cimg,)
    zz, yy, xx = jnp.meshgrid(jnp.linspace(-1.0, 1.0, D),
                              jnp.linspace(-1.0, 1.0, H),
                              jnp.linspace(-1.0, 1.0, W), indexing="ij")
    pos = zz + 0.5 * yy - 0.25 * xx
    grid = base[:, None, None, None] * (1.0 + 0.1 * pos)[None]
    return grid.astype(jnp.bfloat16)


def point_cloud_feature_extractor_stub(point_cloud, pcd_channels, D, H, W,
                                       voxelsize, key):
    # TODO(synk): PointCloudFeatureExtractor (3D feature pyramid) internals not
    # provided; deterministic occupancy-based stand-in of shape
    # [pcd_channels, D, H, W].
    idx = jnp.floor(point_cloud / voxelsize).astype(jnp.int32)
    idx = idx + jnp.array([D // 2, H // 2, W // 2], dtype=jnp.int32)
    idx = jnp.clip(idx, 0, jnp.array([D - 1, H - 1, W - 1], dtype=jnp.int32))
    flat = idx[:, 0] * (H * W) + idx[:, 1] * W + idx[:, 2]
    occ = jnp.zeros((D * H * W,), jnp.float32).at[flat].add(1.0)
    occ = occ.reshape(D, H, W)
    scales = jax.random.normal(key, (pcd_channels,),
                               dtype=jnp.float32) * 0.5 + 1.0
    return (scales[:, None, None, None] * occ[None]).astype(jnp.bfloat16)


# --------------------------------------------------------------------------
# End-to-end forward matching SingleFrameSemanticSegamentation.forward
# --------------------------------------------------------------------------
def single_frame_semantic_segmentation_forward(
        images, point_cloud, intrinsic, rotation, translation, *,
        resolution, voxelsize, img_channels, pcd_channels, output_channels,
        params, classifier_head=True, tile_v=8192):
    C, D, H, W = resolution
    img_grid = image_feature_extractor_stub(
        images, intrinsic, rotation, translation,
        img_channels, D, H, W, params["img_key"])
    pcd_grid = point_cloud_feature_extractor_stub(
        point_cloud, pcd_channels, D, H, W, voxelsize, params["pcd_key"])

    # Single merged (Ci+Cp, D, H, W) bf16 buffer: one full-sublane operand
    # for the kernel (one DMA stream, one K=16 MXU push per lane group).
    x_grid = jnp.concatenate([img_grid, pcd_grid], axis=0)

    out = fuse_and_classify(
        x_grid,
        params["w_fuse"], params["b_fuse"],
        params["w_cls"], params["b_cls"],
        classifier_head=classifier_head, tile_v=tile_v)
    # classifier_head=True  -> [resolution[0] + 1, D, H, W]
    # classifier_head=False -> [output_channels,   D, H, W]
    return out


if __name__ == "__main__":
    # Module hyper-parameters (small, consistent with the PyTorch __init__).
    resolution = [4, 8, 16, 16]         # [C, D, H, W] -> classifier outputs C+1
    voxelsize = 0.5
    img_channels = 8
    pcd_channels = 8
    output_channels = 16
    n_classes = resolution[0] + 1       # 5

    key = jax.random.PRNGKey(0)
    k_img, k_pc, k_in, k_rot, k_tr, k_wi, k_wp, k_wf, k_bf, k_wc, k_bc = \
        jax.random.split(key, 11)

    # Inputs (camera images are NCHW, as in PyTorch).
    images = jax.random.normal(k_img, (2, 3, 32, 32), dtype=jnp.float32)
    point_cloud = jax.random.normal(k_pc, (128, 3), dtype=jnp.float32) * 2.0
    intrinsic = jax.random.normal(k_in, (2, 3, 3), dtype=jnp.float32)
    rotation = jax.random.normal(k_rot, (2, 3, 3), dtype=jnp.float32)
    translation = jax.random.normal(k_tr, (2, 3), dtype=jnp.float32)

    # Deterministic parameters.
    cin = img_channels + pcd_channels
    params = {
        "img_key": k_wi,
        "pcd_key": k_wp,
        "w_fuse": jax.random.normal(k_wf, (cin, output_channels),
                                    dtype=jnp.float32) * 0.1,
        "b_fuse": jax.random.normal(k_bf, (1, output_channels),
                                    dtype=jnp.float32) * 0.1,
        "w_cls": jax.random.normal(k_wc, (output_channels, n_classes),
                                   dtype=jnp.float32) * 0.1,
        "b_cls": jax.random.normal(k_bc, (1, n_classes),
                                   dtype=jnp.float32) * 0.1,
    }

    # classifier_head=True path (fused intermediate never hits HBM).
    logits = single_frame_semantic_segmentation_forward(
        images, point_cloud, intrinsic, rotation, translation,
        resolution=resolution, voxelsize=voxelsize,
        img_channels=img_channels, pcd_channels=pcd_channels,
        output_channels=output_channels, params=params,
        classifier_head=True)
    logits = jax.block_until_ready(logits)
    C, D, H, W = resolution
    assert logits.shape == (n_classes, D, H, W)

    # classifier_head=False path (fused features only).
    fused = single_frame_semantic_segmentation_forward(
        images, point_cloud, intrinsic, rotation, translation,
        resolution=resolution, voxelsize=voxelsize,
        img_channels=img_channels, pcd_channels=pcd_channels,
        output_channels=output_channels, params=params,
        classifier_head=False)
    fused = jax.block_until_ready(fused)
    assert fused.shape == (output_channels, D, H, W)

    # Reference check of the Pallas hot path in plain JAX, emulating the
    # kernel's numerics (bf16-rounded activations/weights, f32 accumulation,
    # bf16-rounded fused intermediate before the classifier, bf16 outputs).
    img_grid = image_feature_extractor_stub(
        images, intrinsic, rotation, translation, img_channels, D, H, W,
        params["img_key"])
    pcd_grid = point_cloud_feature_extractor_stub(
        point_cloud, pcd_channels, D, H, W, voxelsize, params["pcd_key"])
    x = jnp.concatenate([img_grid, pcd_grid],
                        axis=0).astype(jnp.float32).reshape(cin, -1)
    wf_b = params["w_fuse"].astype(jnp.bfloat16).astype(jnp.float32)
    wc_b = params["w_cls"].astype(jnp.bfloat16).astype(jnp.float32)
    fused_ref = jnp.maximum(wf_b.T @ x
                            + params["b_fuse"].reshape(-1, 1), 0.0)
    fused_bf = fused_ref.astype(jnp.bfloat16).astype(jnp.float32)
    logits_ref = wc_b.T @ fused_bf + params["b_cls"].reshape(-1, 1)
    fused_ref = fused_ref.reshape(output_channels, D, H, W)
    logits_ref = logits_ref.reshape(n_classes, D, H, W)

    assert jnp.allclose(logits.astype(jnp.float32), logits_ref,
                        atol=2e-2, rtol=2e-2)
    assert jnp.allclose(fused.astype(jnp.float32), fused_ref,
                        atol=2e-2, rtol=2e-2)

    print("KERNEL_OK")
</pallas_src>

<mosaic_0001>
module attributes {stable_mosaic.version = 11 : i64} {
  func.func @_classify_kernel(%arg0: i32, %arg1: memref<16x1024xbf16, #tpu.memory_space<vmem>>, %arg2: memref<16x16xbf16, #tpu.memory_space<vmem>>, %arg3: memref<16x1xf32, #tpu.memory_space<vmem>>, %arg4: memref<8x16xbf16, #tpu.memory_space<vmem>>, %arg5: memref<8x1xf32, #tpu.memory_space<vmem>>, %arg6: memref<8x1024xbf16, #tpu.memory_space<vmem>>) attributes {dimension_semantics = [#tpu.dimension_semantics<parallel>], iteration_bounds = array<i64: 2>, scalar_prefetch = 0 : i64, scratch_operands = 0 : i64, tpu.core_type = #tpu.core_type<tc>, window_params = [{transform_indices = @transform_0, window_bounds = array<i64: 16, 1024>}, {pipeline_mode = #tpu.pipeline_mode<synchronous>, transform_indices = @transform_1, window_bounds = array<i64: 16, 16>}, {pipeline_mode = #tpu.pipeline_mode<synchronous>, transform_indices = @transform_2, window_bounds = array<i64: 16, 1>}, {pipeline_mode = #tpu.pipeline_mode<synchronous>, transform_indices = @transform_3, window_bounds = array<i64: 8, 16>}, {pipeline_mode = #tpu.pipeline_mode<synchronous>, transform_indices = @transform_4, window_bounds = array<i64: 8, 1>}, {transform_indices = @transform_5, window_bounds = array<i64: 8, 1024>}]} {
    %c0 = arith.constant 0 : index
    %c0_0 = arith.constant 0 : index
    %0 = vector.load %arg2[%c0, %c0_0] : memref<16x16xbf16, #tpu.memory_space<vmem>>, vector<16x16xbf16>
    %c0_1 = arith.constant 0 : index
    %c0_2 = arith.constant 0 : index
    %1 = vector.load %arg1[%c0_1, %c0_2] : memref<16x1024xbf16, #tpu.memory_space<vmem>>, vector<16x1024xbf16>
    %cst = arith.constant dense<0.000000e+00> : vector<16x1024xf32>
    %2 = tpu.matmul %0, %1, %cst {dimension_numbers = #tpu.dot_dimension_numbers<[1], [0], [0], [1], [0, 0, 1, 1], [], []>} : vector<16x16xbf16>, vector<16x1024xbf16>, vector<16x1024xf32> -> vector<16x1024xf32>
    %c0_3 = arith.constant 0 : index
    %c0_4 = arith.constant 0 : index
    %3 = vector.load %arg3[%c0_3, %c0_4] : memref<16x1xf32, #tpu.memory_space<vmem>>, vector<16x1xf32>
    %4 = vector.broadcast %3 : vector<16x1xf32> to vector<16x1024xf32>
    %5 = arith.addf %2, %4 : vector<16x1024xf32>
    %cst_5 = arith.constant 0.000000e+00 : f32
    %6 = vector.broadcast %cst_5 : f32 to vector<16x1024xf32>
    %7 = arith.maximumf %5, %6 : vector<16x1024xf32>
    %8 = arith.truncf %7 : vector<16x1024xf32> to vector<16x1024xbf16>
    %c0_6 = arith.constant 0 : index
    %c0_7 = arith.constant 0 : index
    %9 = vector.load %arg4[%c0_6, %c0_7] : memref<8x16xbf16, #tpu.memory_space<vmem>>, vector<8x16xbf16>
    %cst_8 = arith.constant dense<0.000000e+00> : vector<8x1024xf32>
    %10 = tpu.matmul %9, %8, %cst_8 {dimension_numbers = #tpu.dot_dimension_numbers<[1], [0], [0], [1], [0, 0, 1, 1], [], []>} : vector<8x16xbf16>, vector<16x1024xbf16>, vector<8x1024xf32> -> vector<8x1024xf32>
    %c0_9 = arith.constant 0 : index
    %c0_10 = arith.constant 0 : index
    %11 = vector.load %arg5[%c0_9, %c0_10] : memref<8x1xf32, #tpu.memory_space<vmem>>, vector<8x1xf32>
    %12 = vector.broadcast %11 : vector<8x1xf32> to vector<8x1024xf32>
    %13 = arith.addf %10, %12 : vector<8x1024xf32>
    %14 = arith.truncf %13 : vector<8x1024xf32> to vector<8x1024xbf16>
    %c0_11 = arith.constant 0 : index
    %c0_12 = arith.constant 0 : index
    %15 = vector.load %arg6[%c0_11, %c0_12] : memref<8x1024xbf16, #tpu.memory_space<vmem>>, vector<8x1024xbf16>
    tpu.vector_store %arg6[%c0_11, %c0_12], %14 {strides = array<i32>} : memref<8x1024xbf16, #tpu.memory_space<vmem>>, vector<8x1024xbf16>,
    return
  }
  func.func @transform_0(%arg0: i32) -> (i32, i32) {
    %c0_i32 = arith.constant 0 : i32
    %c0_i32_0 = arith.constant 0 : i32
    return %c0_i32, %arg0 : i32, i32
  }
  func.func @transform_1(%arg0: i32) -> (i32, i32) {
    %c0_i32 = arith.constant 0 : i32
    %c0_i32_0 = arith.constant 0 : i32
    %c0_i32_1 = arith.constant 0 : i32
    return %c0_i32, %c0_i32_0 : i32, i32
  }
  func.func @transform_2(%arg0: i32) -> (i32, i32) {
    %c0_i32 = arith.constant 0 : i32
    %c0_i32_0 = arith.constant 0 : i32
    %c0_i32_1 = arith.constant 0 : i32
    return %c0_i32, %c0_i32_0 : i32, i32
  }
  func.func @transform_3(%arg0: i32) -> (i32, i32) {
    %c0_i32 = arith.constant 0 : i32
    %c0_i32_0 = arith.constant 0 : i32
    %c0_i32_1 = arith.constant 0 : i32
    return %c0_i32, %c0_i32_0 : i32, i32
  }
  func.func @transform_4(%arg0: i32) -> (i32, i32) {
    %c0_i32 = arith.constant 0 : i32
    %c0_i32_0 = arith.constant 0 : i32
    %c0_i32_1 = arith.constant 0 : i32
    return %c0_i32, %c0_i32_0 : i32, i32
  }
  func.func @transform_5(%arg0: i32) -> (i32, i32) {
    %c0_i32 = arith.constant 0 : i32
    %c0_i32_0 = arith.constant 0 : i32
    return %c0_i32, %arg0 : i32, i32
  }
}

</mosaic_0001>

<llo_original>
// kernel: tpu_custom_call.1
$region0: #{tpu_custom_call.1}
  #allocation0 [shape = 'u32[]', space=smem, size = 0x4, offset = 0x4, fixed_abs, tag = 'smem constant byte address 0x4 - core index']
  #allocation1 [shape = 'u32[144,128]{1,0:T(1,128)}', space=vmem, size = 0x12000, scoped, tag = 'internal scratch']
  %s0 = inlined_call_operand.hbm [shape: bf16[16,2048], index: 0, kind: input, shape index: {}]
  %s1 = inlined_call_operand.vmem [shape: bf16[16,16], index: 1, kind: input, shape index: {}]
  %s2 = inlined_call_operand.vmem [shape: f32[16,1], index: 2, kind: input, shape index: {}]
  %s3 = inlined_call_operand.vmem [shape: bf16[8,16], index: 3, kind: input, shape index: {}]
  %s4 = inlined_call_operand.vmem [shape: f32[8,1], index: 4, kind: input, shape index: {}]
  %s5 = inlined_call_operand.hbm [shape: bf16[8,2048], index: 5, kind: output, shape index: {}]
  %s6 = sld [smem:[#allocation0]]
  $region57: #{tpu_custom_call.1} parent=0
    _
  %s8 = ssub.s32 1, %s6
  %s9 = scalar_select 0, %s8, %s6
  $region1: #{tpu_custom_call.1} parent=0
    #allocation2 [shape = 'u8[65536]{0}', space=vmem, size = 0x10000, scoped, tag = 'input window, operand 0']
    #allocation3 [shape = 's32[2]{0}', space=sflag, size = 0x8, scoped, tag = 'scoped memory for tpu_custom_call.1']
    #allocation4 [shape = 's32[2]{0}', space=sflag, size = 0x8, scoped, tag = 'scoped memory for tpu_custom_call.1']
    #allocation5 [shape = 'u8[32768]{0}', space=vmem, size = 0x8000, scoped, tag = 'output window, operand 0']
    %10 = vsyncpa [#allocation3], 0
    %s11 = scalar_lea.sflag [#allocation3], 1
    %12 = vsyncpa %s11, 0
    %13 = vsyncpa [#allocation4], 0
    %s14 = scalar_lea.sflag [#allocation4], 1
    %15 = vsyncpa %s14, 0
    loop: start=0, step=1, limit=4
    $region2: #{tpu_custom_call.1} parent=1 // loop_pre_header
      _
    $region3: #{tpu_custom_call.1} parent=1 // loop_header
      %s17 = sphi 0, %s21
      %p18 = scmp.ge.s32.totalorder %s17, 4
      %s27 = sphi 0, %s29
      %s30 = sphi 0, %s27
      %s31 = sphi 0, %s30
      %s47 = sphi 0, %s31
      %s51 = sphi 0, %s51
      %s53 = sphi 0, %s51
      %s54 = sphi 0, %s53
      %s68 = sphi 0, %s54
      %s72 = sphi 0, %s72
      %s74 = sphi 0, %s72
      %s75 = sphi 0, %s74
      %s89 = sphi 0, %s75
      %s93 = sphi 0, %s93
      %s95 = sphi 0, %s93
      %s96 = sphi 0, %s95
      %s110 = sphi 0, %s96
      %s114 = sphi 0, %s114
      %s116 = sphi 0, %s114
      %s117 = sphi 0, %s116
      %s131 = sphi 0, %s117
      %s137 = sphi 0, %s139
      %s140 = sphi 0, %s137
      %s141 = sphi 0, %s140
      %s157 = sphi 0, %s141
    $region4: #{tpu_custom_call.1} parent=1 // loop_header_branch
      %20 = sbr.rel (%p18) target = $region8
    $region5: #{tpu_custom_call.1} parent=1 // loop_body
      %s22 = ssub.s32 %s17, 1
      %s23 = ssub.s32 %s17, 2
      %s24 = sadd.s32 %s17, 1
      %s25 = ssub.s32 %s17, %s24
      %p26 = scmp.eq.s32.totalorder %s25, 0
      %s28 = sadd.s32 %s27, 1
      %s29 = scalar_select %p26, %s27, %s28
      %p32 = pneg %p26
      %p33 = scmp.eq.s32.totalorder %s17, 1
      %p34 = por %p32, %p33
      %p35 = scmp.ne.s32.totalorder %s27, %s30
      %p36 = scmp.eq.s32.totalorder %s17, 0
      %p37 = por %p35, %p36
      %p38 = scmp.ne.s32.totalorder %s27, %s30
      %p39 = scmp.eq.s32.totalorder %s22, 1
      %p40 = por %p38, %p39
      %p41 = scmp.ne.s32.totalorder %s30, %s31
      %p42 = scmp.eq.s32.totalorder %s22, 0
      %p43 = por %p41, %p42
      %p44 = scmp.ne.s32.totalorder %s30, %s31
      %p45 = scmp.eq.s32.totalorder %s23, 1
      %p46 = por %p44, %p45
      %p48 = scmp.ne.s32.totalorder %s31, %s47
      %p49 = scmp.eq.s32.totalorder %s23, 0
      %p50 = por %p48, %p49
      %s52 = sadd.s32 %s51, 1
      %p55 = scmp.eq.s32.totalorder %s17, 1
      %p56 = scmp.ne.s32.totalorder %s51, %s53
      %p57 = scmp.eq.s32.totalorder %s17, 0
      %p58 = por %p56, %p57
      %p59 = scmp.ne.s32.totalorder %s51, %s53
      %p60 = scmp.eq.s32.totalorder %s22, 1
      %p61 = por %p59, %p60
      %p62 = scmp.ne.s32.totalorder %s53, %s54
      %p63 = scmp.eq.s32.totalorder %s22, 0
      %p64 = por %p62, %p63
      %p65 = scmp.ne.s32.totalorder %s53, %s54
      %p66 = scmp.eq.s32.totalorder %s23, 1
      %p67 = por %p65, %p66
      %p69 = scmp.ne.s32.totalorder %s54, %s68
      %p70 = scmp.eq.s32.totalorder %s23, 0
      %p71 = por %p69, %p70
      %s73 = sadd.s32 %s72, 1
      %p76 = scmp.eq.s32.totalorder %s17, 1
      %p77 = scmp.ne.s32.totalorder %s72, %s74
      %p78 = scmp.eq.s32.totalorder %s17, 0
      %p79 = por %p77, %p78
      %p80 = scmp.ne.s32.totalorder %s72, %s74
      %p81 = scmp.eq.s32.totalorder %s22, 1
      %p82 = por %p80, %p81
      %p83 = scmp.ne.s32.totalorder %s74, %s75
      %p84 = scmp.eq.s32.totalorder %s22, 0
      %p85 = por %p83, %p84
      %p86 = scmp.ne.s32.totalorder %s74, %s75
      %p87 = scmp.eq.s32.totalorder %s23, 1
      %p88 = por %p86, %p87
      %p90 = scmp.ne.s32.totalorder %s75, %s89
      %p91 = scmp.eq.s32.totalorder %s23, 0
      %p92 = por %p90, %p91
      %s94 = sadd.s32 %s93, 1
      %p97 = scmp.eq.s32.totalorder %s17, 1
      %p98 = scmp.ne.s32.totalorder %s93, %s95
      %p99 = scmp.eq.s32.totalorder %s17, 0
      %p100 = por %p98, %p99
      %p101 = scmp.ne.s32.totalorder %s93, %s95
      %p102 = scmp.eq.s32.totalorder %s22, 1
      %p103 = por %p101, %p102
      %p104 = scmp.ne.s32.totalorder %s95, %s96
      %p105 = scmp.eq.s32.totalorder %s22, 0
      %p106 = por %p104, %p105
      %p107 = scmp.ne.s32.totalorder %s95, %s96
      %p108 = scmp.eq.s32.totalorder %s23, 1
      %p109 = por %p107, %p108
      %p111 = scmp.ne.s32.totalorder %s96, %s110
      %p112 = scmp.eq.s32.totalorder %s23, 0
      %p113 = por %p111, %p112
      %s115 = sadd.s32 %s114, 1
      %p118 = scmp.eq.s32.totalorder %s17, 1
      %p119 = scmp.ne.s32.totalorder %s114, %s116
      %p120 = scmp.eq.s32.totalorder %s17, 0
      %p121 = por %p119, %p120
      %p122 = scmp.ne.s32.totalorder %s114, %s116
      %p123 = scmp.eq.s32.totalorder %s22, 1
      %p124 = por %p122, %p123
      %p125 = scmp.ne.s32.totalorder %s116, %s117
      %p126 = scmp.eq.s32.totalorder %s22, 0
      %p127 = por %p125, %p126
      %p128 = scmp.ne.s32.totalorder %s116, %s117
      %p129 = scmp.eq.s32.totalorder %s23, 1
      %p130 = por %p128, %p129
      %p132 = scmp.ne.s32.totalorder %s117, %s131
      %p133 = scmp.eq.s32.totalorder %s23, 0
      %p134 = por %p132, %p133
      %s135 = ssub.s32 %s17, %s24
      %p136 = scmp.eq.s32.totalorder %s135, 0
      %s138 = sadd.s32 %s137, 1
      %s139 = scalar_select %p136, %s137, %s138
      %p142 = pneg %p136
      %p143 = scmp.eq.s32.totalorder %s17, 1
      %p144 = por %p142, %p143
      %p145 = scmp.ne.s32.totalorder %s137, %s140
      %p146 = scmp.eq.s32.totalorder %s17, 0
      %p147 = por %p145, %p146
      %p148 = scmp.ne.s32.totalorder %s137, %s140
      %p149 = scmp.eq.s32.totalorder %s22, 1
      %p150 = por %p148, %p149
      %p151 = scmp.ne.s32.totalorder %s140, %s141
      %p152 = scmp.eq.s32.totalorder %s22, 0
      %p153 = por %p151, %p152
      %p154 = scmp.ne.s32.totalorder %s140, %s141
      %p155 = scmp.eq.s32.totalorder %s23, 1
      %p156 = por %p154, %p155
      %p158 = scmp.ne.s32.totalorder %s141, %s157
      %p159 = scmp.eq.s32.totalorder %s23, 0
      %p160 = por %p158, %p159
      %p161 = scmp.le.s32.totalorder 1, %s17
      %p162 = scmp.lt.s32.totalorder %s17, 3
      %p163 = pnand %p161, %p162
      %p164 = pneg %p163
      // Predicated region
      $region9: #{tpu_custom_call.1} parent=5 // pred_check
        _
      $region10: #{tpu_custom_call.1} parent=5 // pred_check_branch
        %166 = sbr.rel (%p163) target = $region12
      $region11: #{tpu_custom_call.1} parent=5 // pred_region
        %s167 = ssub.s32 %s17, 1
        // Predicated region
        $region13: #{tpu_custom_call.1} parent=11 // pred_check
          %p168 = pneg %p64
        $region14: #{tpu_custom_call.1} parent=11 // pred_check_branch
          %170 = sbr.rel (%p168) target = $region16
        $region15: #{tpu_custom_call.1} parent=11 // pred_region
          _
        $region16: #{tpu_custom_call.1} parent=11 // pred_fallthru
          _
        // Predicated region
        $region17: #{tpu_custom_call.1} parent=11 // pred_check
          %p171 = pneg %p85
        $region18: #{tpu_custom_call.1} parent=11 // pred_check_branch
          %173 = sbr.rel (%p171) target = $region20
        $region19: #{tpu_custom_call.1} parent=11 // pred_region
          _
        $region20: #{tpu_custom_call.1} parent=11 // pred_fallthru
          _
        // Predicated region
        $region21: #{tpu_custom_call.1} parent=11 // pred_check
          %p174 = pneg %p106
        $region22: #{tpu_custom_call.1} parent=11 // pred_check_branch
          %176 = sbr.rel (%p174) target = $region24
        $region23: #{tpu_custom_call.1} parent=11 // pred_region
          _
        $region24: #{tpu_custom_call.1} parent=11 // pred_fallthru
          _
        // Predicated region
        $region25: #{tpu_custom_call.1} parent=11 // pred_check
          %p177 = pneg %p127
        $region26: #{tpu_custom_call.1} parent=11 // pred_check_branch
          %179 = sbr.rel (%p177) target = $region28
        $region27: #{tpu_custom_call.1} parent=11 // pred_region
          _
        $region28: #{tpu_custom_call.1} parent=11 // pred_fallthru
          _
      $region12: #{tpu_custom_call.1} parent=5 // pred_fallthru
        _
      %p180 = scmp.lt.s32.totalorder %s17, 2
      // Predicated region
      $region29: #{tpu_custom_call.1} parent=5 // pred_check
        %p181 = pneg %p180
      $region30: #{tpu_custom_call.1} parent=5 // pred_check_branch
        %183 = sbr.rel (%p181) target = $region32
      $region31: #{tpu_custom_call.1} parent=5 // pred_region
        // Predicated region
        $region33: #{tpu_custom_call.1} parent=31 // pred_check
          %p184 = pneg %p37
        $region34: #{tpu_custom_call.1} parent=31 // pred_check_branch
          %186 = sbr.rel (%p184) target = $region36
        $region35: #{tpu_custom_call.1} parent=31 // pred_region
          %s187 = sand.u32 %s27, 1
          %s188 = scalar_lea.sflag [#allocation3], %s187
          %s189 = sand.u32 %s27, 1
          %s190 = smul.addr %s189, 64
          %s191 = scalar_lea.vmem [#allocation2], %s190
          %s192 = smul.u32 8, %s17
          %s194 = ssub.s32 1024, 1024
          %195 = vsyncadd %s188, %s194
          %s196 = smul.addr %s192, 64
          %s197 = scalar_lea.hbm %s0, %s196
          %s198 = sshll.u32 %s191, 4
          %s199 = int_to_ptr.vmem [resolvable:$true] %s198
          %204 = dma.hbm_to_vmem [thread:$0]  %s197, 1024, %s199, %s188, 1024, 512, 32
        $region36: #{tpu_custom_call.1} parent=31 // pred_fallthru
          _
      $region32: #{tpu_custom_call.1} parent=5 // pred_fallthru
        _
      %p205 = scmp.le.s32.totalorder 1, %s17
      %p206 = scmp.lt.s32.totalorder %s17, 3
      %p207 = pnand %p205, %p206
      %p208 = pneg %p207
      // Predicated region
      $region37: #{tpu_custom_call.1} parent=5 // pred_check
        _
      $region38: #{tpu_custom_call.1} parent=5 // pred_check_branch
        %210 = sbr.rel (%p207) target = $region40
      $region39: #{tpu_custom_call.1} parent=5 // pred_region
        %s211 = ssub.s32 %s17, 1
        %s212 = sand.u32 %s30, 1
        %s213 = scalar_lea.sflag [#allocation3], %s212
        %s214 = sand.u32 %s30, 1
        %s215 = smul.addr %s214, 64
        %s216 = scalar_lea.vmem [#allocation2], %s215
        // Predicated region
        $region41: #{tpu_custom_call.1} parent=39 // pred_check
          %p217 = pneg %p43
        $region42: #{tpu_custom_call.1} parent=39 // pred_check_branch
          %219 = sbr.rel (%p217) target = $region44
        $region43: #{tpu_custom_call.1} parent=39 // pred_region
          %220 = dma.done %s213, 1024
        $region44: #{tpu_custom_call.1} parent=39 // pred_fallthru
          _
        %s221 = sand.u32 %s30, 1
        %s222 = scalar_lea.sflag [#allocation3], %s221
        %s223 = sand.u32 %s30, 1
        %s224 = smul.addr %s223, 64
        %s225 = scalar_lea.vmem [#allocation2], %s224
        %p226 = pneg %p43
        %p227 = pneg %p40
        %p228 = pneg %p64
        %p229 = pneg %p61
        %p230 = pneg %p85
        %p231 = pneg %p82
        %p232 = pneg %p106
        %p233 = pneg %p103
        %p234 = pneg %p127
        %p235 = pneg %p124
        %p236 = pneg %p153
        %p237 = pneg %p150
        %s238 = sand.u32 %s140, 1
        %s239 = scalar_lea.sflag [#allocation4], %s238
        %s240 = sand.u32 %s140, 1
        %s241 = smul.addr %s240, 32
        %s242 = scalar_lea.vmem [#allocation5], %s241
        %s243 = smul.u32 8, %s22
        %s244 = smul.u32 8, %s22
        %v246 = vld [vmem:[%s1] sm:$0xf]
        %v247 = vld [vmem:[%s1 + $0x4] sm:$0xf]
        %v248 = vld [vmem:[%s216] sm:$0xff]
        %v249 = vld [vmem:[%s216 + $0x8] sm:$0xff]
        %v250 = vld [vmem:[%s216 + $0x10] sm:$0xff]
        %v251 = vld [vmem:[%s216 + $0x18] sm:$0xff]
        %v252 = vld [vmem:[%s216 + $0x20] sm:$0xff]
        %v253 = vld [vmem:[%s216 + $0x28] sm:$0xff]
        %v254 = vld [vmem:[%s216 + $0x30] sm:$0xff]
        %v255 = vld [vmem:[%s216 + $0x38] sm:$0xff]
        %v256 = vld [vmem:[%s2] sm:$0xff]
        %v257 = vld [vmem:[%s2 + $0x8] sm:$0xff]
        %259 = vset.pattern.permute.xlu0 0
        %260 = vperm.xlu0 %259, %v256
        %v261 = vpop.permute.xlu0 %260
        %264 = vset.pattern.permute.xlu0 0
        %265 = vperm.xlu0 %264, %v257
        %v266 = vpop.permute.xlu0 %265
        %v270 = vunpack.c.l.b16 %v246
        %v271 = vunpack.c.l.b16 %v247
        %v272 = vpack.c.b16 %v271, %v270
        %v281 = vunpack.c.l.b16 %v248
        %v282 = vunpack.c.h.b16 %v248
        %v283 = vunpack.c.l.b16 %v249
        %v284 = vunpack.c.h.b16 %v249
        %v285 = vunpack.c.l.b16 %v250
        %v286 = vunpack.c.h.b16 %v250
        %v287 = vunpack.c.l.b16 %v251
        %v288 = vunpack.c.h.b16 %v251
        %v289 = vunpack.c.l.b16 %v252
        %v290 = vunpack.c.h.b16 %v252
        %v291 = vunpack.c.l.b16 %v253
        %v292 = vunpack.c.h.b16 %v253
        %v293 = vunpack.c.l.b16 %v254
        %v294 = vunpack.c.h.b16 %v254
        %v295 = vunpack.c.l.b16 %v255
        %v296 = vunpack.c.h.b16 %v255
        %v297 = vpack.c.b16 %v289, %v281
        %v298 = vpack.c.b16 %v290, %v282
        %v299 = vpack.c.b16 %v291, %v283
        %v300 = vpack.c.b16 %v292, %v284
        %v301 = vpack.c.b16 %v293, %v285
        %v302 = vpack.c.b16 %v294, %v286
        %v303 = vpack.c.b16 %v295, %v287
        %v304 = vpack.c.b16 %v296, %v288
        %vm313 = vcmask 130048
        %v315 = vsel %vm313, %v272, 0
        %317 = vmatprep.subr.bf16.mxu0 %v298
        %318 = vmatpush1.bf16.msra.mxu0 %v297
        %319 = vmatprep.subr.bf16.mxu0 0
        %320 = vmatpush1.bf16.msra.mxu0 0
        %321 = vmatprep.subr.bf16.mxu0 0
        %322 = vmatpush1.bf16.msra.mxu0 0
        %323 = vmatprep.subr.bf16.mxu0 0
        %324 = vmatpush1.bf16.msra.mxu0 0
        %325 = vmatprep.subr.bf16.mxu0 0
        %326 = vmatpush1.bf16.msra.mxu0 0
        %327 = vmatprep.subr.bf16.mxu0 0
        %328 = vmatpush1.bf16.msra.mxu0 0
        %329 = vmatprep.subr.bf16.mxu0 0
        %330 = vmatpush1.bf16.msra.mxu0 0
        %331 = vmatprep.subr.bf16.mxu0 0
        %332 = vmatpush1.bf16.msra.mxu0 0
        %333 = vmatprep.subr.bf16.mxu0 0
        %334 = vmatpush1.bf16.msra.mxu0 0
        %335 = vmatprep.subr.bf16.mxu0 0
        %336 = vmatpush1.bf16.msra.mxu0 0
        %337 = vmatprep.subr.bf16.mxu0 0
        %338 = vmatpush1.bf16.msra.mxu0 0
        %339 = vmatprep.subr.bf16.mxu0 0
        %340 = vmatpush1.bf16.msra.mxu0 0
        %341 = vmatprep.subr.bf16.mxu0 0
        %342 = vmatpush1.bf16.msra.mxu0 0
        %343 = vmatprep.subr.bf16.mxu0 0
        %344 = vmatpush1.bf16.msra.mxu0 0
        %345 = vmatprep.subr.bf16.mxu0 0
        %346 = vmatpush1.bf16.msra.mxu0 0
        %347 = vmatprep.subr.bf16.mxu0 0
        %348 = vmatpush1.bf16.msra.mxu0 0
        %349 = vmatprep.mubr.bf16.mxu0 0
        %350 = vmatmul.mubr.bf16.gmra.mrb[0].mxu0 %v315
        %v351 = vpop.f32.mrb[0].mxu0
        %v352 = vadd.f32 %v261, %v351
        %v353 = vpop.f32.mrb[0].mxu0
        %v354 = vadd.f32 %v261, %v353
        %v355 = vpop.f32.mrb[0].mxu0
        %v356 = vadd.f32 %v266, %v355
        %v357 = vpop.f32.mrb[0].mxu0
        %v358 = vadd.f32 %v266, %v357
        %359 = vdwg.mxu0
        %360 = vmatprep.subr.bf16.mxu0 %v300
        %361 = vmatpush1.bf16.msra.mxu0 %v299
        %362 = vmatprep.subr.bf16.mxu0 0
        %363 = vmatpush1.bf16.msra.mxu0 0
        %364 = vmatprep.subr.bf16.mxu0 0
        %365 = vmatpush1.bf16.msra.mxu0 0
        %366 = vmatprep.subr.bf16.mxu0 0
        %367 = vmatpush1.bf16.msra.mxu0 0
        %368 = vmatprep.subr.bf16.mxu0 0
        %369 = vmatpush1.bf16.msra.mxu0 0
        %370 = vmatprep.subr.bf16.mxu0 0
        %371 = vmatpush1.bf16.msra.mxu0 0
        %372 = vmatprep.subr.bf16.mxu0 0
        %373 = vmatpush1.bf16.msra.mxu0 0
        %374 = vmatprep.subr.bf16.mxu0 0
        %375 = vmatpush1.bf16.msra.mxu0 0
        %376 = vmatprep.subr.bf16.mxu0 0
        %377 = vmatpush1.bf16.msra.mxu0 0
        %378 = vmatprep.subr.bf16.mxu0 0
        %379 = vmatpush1.bf16.msra.mxu0 0
        %380 = vmatprep.subr.bf16.mxu0 0
        %381 = vmatpush1.bf16.msra.mxu0 0
        %382 = vmatprep.subr.bf16.mxu0 0
        %383 = vmatpush1.bf16.msra.mxu0 0
        %384 = vmatprep.subr.bf16.mxu0 0
        %385 = vmatpush1.bf16.msra.mxu0 0
        %386 = vmatprep.subr.bf16.mxu0 0
        %387 = vmatpush1.bf16.msra.mxu0 0
        %388 = vmatprep.subr.bf16.mxu0 0
        %389 = vmatpush1.bf16.msra.mxu0 0
        %390 = vmatprep.subr.bf16.mxu0 0
        %391 = vmatpush1.bf16.msra.mxu0 0
        %392 = vmatprep.mubr.bf16.mxu0 0
        %393 = vmatmul.mubr.bf16.gmra.mrb[0].mxu0 %v315
        %v394 = vpop.f32.mrb[0].mxu0
        %v395 = vadd.f32 %v261, %v394
        %v396 = vpop.f32.mrb[0].mxu0
        %v397 = vadd.f32 %v261, %v396
        %v398 = vpop.f32.mrb[0].mxu0
        %v399 = vadd.f32 %v266, %v398
        %v400 = vpop.f32.mrb[0].mxu0
        %v401 = vadd.f32 %v266, %v400
        %402 = vdwg.mxu0
        %403 = vmatprep.subr.bf16.mxu0 %v302
        %404 = vmatpush1.bf16.msra.mxu0 %v301
        %405 = vmatprep.subr.bf16.mxu0 0
        %406 = vmatpush1.bf16.msra.mxu0 0
        %407 = vmatprep.subr.bf16.mxu0 0
        %408 = vmatpush1.bf16.msra.mxu0 0
        %409 = vmatprep.subr.bf16.mxu0 0
        %410 = vmatpush1.bf16.msra.mxu0 0
        %411 = vmatprep.subr.bf16.mxu0 0
        %412 = vmatpush1.bf16.msra.mxu0 0
        %413 = vmatprep.subr.bf16.mxu0 0
        %414 = vmatpush1.bf16.msra.mxu0 0
        %415 = vmatprep.subr.bf16.mxu0 0
        %416 = vmatpush1.bf16.msra.mxu0 0
        %417 = vmatprep.subr.bf16.mxu0 0
        %418 = vmatpush1.bf16.msra.mxu0 0
        %419 = vmatprep.subr.bf16.mxu0 0
        %420 = vmatpush1.bf16.msra.mxu0 0
        %421 = vmatprep.subr.bf16.mxu0 0
        %422 = vmatpush1.bf16.msra.mxu0 0
        %423 = vmatprep.subr.bf16.mxu0 0
        %424 = vmatpush1.bf16.msra.mxu0 0
        %425 = vmatprep.subr.bf16.mxu0 0
        %426 = vmatpush1.bf16.msra.mxu0 0
        %427 = vmatprep.subr.bf16.mxu0 0
        %428 = vmatpush1.bf16.msra.mxu0 0
        %429 = vmatprep.subr.bf16.mxu0 0
        %430 = vmatpush1.bf16.msra.mxu0 0
        %431 = vmatprep.subr.bf16.mxu0 0
        %432 = vmatpush1.bf16.msra.mxu0 0
        %433 = vmatprep.subr.bf16.mxu0 0
        %434 = vmatpush1.bf16.msra.mxu0 0
        %435 = vmatprep.mubr.bf16.mxu0 0
        %436 = vmatmul.mubr.bf16.gmra.mrb[0].mxu0 %v315
        %v437 = vpop.f32.mrb[0].mxu0
        %v438 = vadd.f32 %v261, %v437
        %v439 = vpop.f32.mrb[0].mxu0
        %v440 = vadd.f32 %v261, %v439
        %v441 = vpop.f32.mrb[0].mxu0
        %v442 = vadd.f32 %v266, %v441
        %v443 = vpop.f32.mrb[0].mxu0
        %v444 = vadd.f32 %v266, %v443
        %445 = vdwg.mxu0
        %446 = vmatprep.subr.bf16.mxu0 %v304
        %447 = vmatpush1.bf16.msra.mxu0 %v303
        %448 = vmatprep.subr.bf16.mxu0 0
        %449 = vmatpush1.bf16.msra.mxu0 0
        %450 = vmatprep.subr.bf16.mxu0 0
        %451 = vmatpush1.bf16.msra.mxu0 0
        %452 = vmatprep.subr.bf16.mxu0 0
        %453 = vmatpush1.bf16.msra.mxu0 0
        %454 = vmatprep.subr.bf16.mxu0 0
        %455 = vmatpush1.bf16.msra.mxu0 0
        %456 = vmatprep.subr.bf16.mxu0 0
        %457 = vmatpush1.bf16.msra.mxu0 0
        %458 = vmatprep.subr.bf16.mxu0 0
        %459 = vmatpush1.bf16.msra.mxu0 0
        %460 = vmatprep.subr.bf16.mxu0 0
        %461 = vmatpush1.bf16.msra.mxu0 0
        %462 = vmatprep.subr.bf16.mxu0 0
        %463 = vmatpush1.bf16.msra.mxu0 0
        %464 = vmatprep.subr.bf16.mxu0 0
        %465 = vmatpush1.bf16.msra.mxu0 0
        %466 = vmatprep.subr.bf16.mxu0 0
        %467 = vmatpush1.bf16.msra.mxu0 0
        %468 = vmatprep.subr.bf16.mxu0 0
        %469 = vmatpush1.bf16.msra.mxu0 0
        %470 = vmatprep.subr.bf16.mxu0 0
        %471 = vmatpush1.bf16.msra.mxu0 0
        %472 = vmatprep.subr.bf16.mxu0 0
        %473 = vmatpush1.bf16.msra.mxu0 0
        %474 = vmatprep.subr.bf16.mxu0 0
        %475 = vmatpush1.bf16.msra.mxu0 0
        %476 = vmatprep.subr.bf16.mxu0 0
        %477 = vmatpush1.bf16.msra.mxu0 0
        %478 = vmatprep.mubr.bf16.mxu0 0
        %479 = vmatmul.mubr.bf16.gmra.mrb[0].mxu0 %v315
        %v480 = vpop.f32.mrb[0].mxu0
        %v481 = vadd.f32 %v261, %v480
        %v482 = vpop.f32.mrb[0].mxu0
        %v483 = vadd.f32 %v261, %v482
        %v484 = vpop.f32.mrb[0].mxu0
        %v485 = vadd.f32 %v266, %v484
        %v486 = vpop.f32.mrb[0].mxu0
        %v487 = vadd.f32 %v266, %v486
        %488 = vdwg.mxu0
        %v489 = vmax.f32 %v352, 0.0
        %v490 = vmax.f32 %v354, 0.0
        %v491 = vmax.f32 %v395, 0.0
        %v492 = vmax.f32 %v397, 0.0
        %v493 = vmax.f32 %v438, 0.0
        %v494 = vmax.f32 %v440, 0.0
        %v495 = vmax.f32 %v481, 0.0
        %v496 = vmax.f32 %v483, 0.0
        %v497 = vmax.f32 %v356, 0.0
        %v498 = vmax.f32 %v358, 0.0
        %v499 = vmax.f32 %v399, 0.0
        %v500 = vmax.f32 %v401, 0.0
        %v501 = vmax.f32 %v442, 0.0
        %v502 = vmax.f32 %v444, 0.0
        %v503 = vmax.f32 %v485, 0.0
        %v504 = vmax.f32 %v487, 0.0
        %v505 = vpack.c.bf16 %v497, %v489
        %v506 = vpack.c.bf16 %v498, %v490
        %v507 = vpack.c.bf16 %v499, %v491
        %v508 = vpack.c.bf16 %v500, %v492
        %v509 = vpack.c.bf16 %v501, %v493
        %v510 = vpack.c.bf16 %v502, %v494
        %v511 = vpack.c.bf16 %v503, %v495
        %v512 = vpack.c.bf16 %v504, %v496
        %v513 = vld [vmem:[%s3] sm:$0xf]
        %v514 = vld [vmem:[%s4] sm:$0xff]
        %516 = vset.pattern.permute.xlu0 0
        %517 = vperm.xlu0 %516, %v514
        %v518 = vpop.permute.xlu0 %517
        %v521 = vsel %vm313, %v513, 0
        %523 = vmatprep.subr.bf16.mxu0 %v506
        %524 = vmatpush1.bf16.msra.mxu0 %v505
        %525 = vmatprep.subr.bf16.mxu0 0
        %526 = vmatpush1.bf16.msra.mxu0 0
        %527 = vmatprep.subr.bf16.mxu0 0
        %528 = vmatpush1.bf16.msra.mxu0 0
        %529 = vmatprep.subr.bf16.mxu0 0
        %530 = vmatpush1.bf16.msra.mxu0 0
        %531 = vmatprep.subr.bf16.mxu0 0
        %532 = vmatpush1.bf16.msra.mxu0 0
        %533 = vmatprep.subr.bf16.mxu0 0
        %534 = vmatpush1.bf16.msra.mxu0 0
        %535 = vmatprep.subr.bf16.mxu0 0
        %536 = vmatpush1.bf16.msra.mxu0 0
        %537 = vmatprep.subr.bf16.mxu0 0
        %538 = vmatpush1.bf16.msra.mxu0 0
        %539 = vmatprep.subr.bf16.mxu0 0
        %540 = vmatpush1.bf16.msra.mxu0 0
        %541 = vmatprep.subr.bf16.mxu0 0
        %542 = vmatpush1.bf16.msra.mxu0 0
        %543 = vmatprep.subr.bf16.mxu0 0
        %544 = vmatpush1.bf16.msra.mxu0 0
        %545 = vmatprep.subr.bf16.mxu0 0
        %546 = vmatpush1.bf16.msra.mxu0 0
        %547 = vmatprep.subr.bf16.mxu0 0
        %548 = vmatpush1.bf16.msra.mxu0 0
        %549 = vmatprep.subr.bf16.mxu0 0
        %550 = vmatpush1.bf16.msra.mxu0 0
        %551 = vmatprep.subr.bf16.mxu0 0
        %552 = vmatpush1.bf16.msra.mxu0 0
        %553 = vmatprep.subr.bf16.mxu0 0
        %554 = vmatpush1.bf16.msra.mxu0 0
        %555 = vmatprep.mubr.bf16.mxu0 0
        %556 = vmatmul.mubr.bf16.gmra.mrb[0].mxu0 %v521
        %v557 = vpop.f32.mrb[0].mxu0
        %v558 = vadd.f32 %v518, %v557
        %v559 = vpop.f32.mrb[0].mxu0
        %v560 = vadd.f32 %v518, %v559
        %v561 = vpop.f32.mrb[0].mxu0
        %v562 = vpop.f32.mrb[0].mxu0
        %563 = vdwg.mxu0
        %564 = vmatprep.subr.bf16.mxu0 %v508
        %565 = vmatpush1.bf16.msra.mxu0 %v507
        %566 = vmatprep.subr.bf16.mxu0 0
        %567 = vmatpush1.bf16.msra.mxu0 0
        %568 = vmatprep.subr.bf16.mxu0 0
        %569 = vmatpush1.bf16.msra.mxu0 0
        %570 = vmatprep.subr.bf16.mxu0 0
        %571 = vmatpush1.bf16.msra.mxu0 0
        %572 = vmatprep.subr.bf16.mxu0 0
        %573 = vmatpush1.bf16.msra.mxu0 0
        %574 = vmatprep.subr.bf16.mxu0 0
        %575 = vmatpush1.bf16.msra.mxu0 0
        %576 = vmatprep.subr.bf16.mxu0 0
        %577 = vmatpush1.bf16.msra.mxu0 0
        %578 = vmatprep.subr.bf16.mxu0 0
        %579 = vmatpush1.bf16.msra.mxu0 0
        %580 = vmatprep.subr.bf16.mxu0 0
        %581 = vmatpush1.bf16.msra.mxu0 0
        %582 = vmatprep.subr.bf16.mxu0 0
        %583 = vmatpush1.bf16.msra.mxu0 0
        %584 = vmatprep.subr.bf16.mxu0 0
        %585 = vmatpush1.bf16.msra.mxu0 0
        %586 = vmatprep.subr.bf16.mxu0 0
        %587 = vmatpush1.bf16.msra.mxu0 0
        %588 = vmatprep.subr.bf16.mxu0 0
        %589 = vmatpush1.bf16.msra.mxu0 0
        %590 = vmatprep.subr.bf16.mxu0 0
        %591 = vmatpush1.bf16.msra.mxu0 0
        %592 = vmatprep.subr.bf16.mxu0 0
        %593 = vmatpush1.bf16.msra.mxu0 0
        %594 = vmatprep.subr.bf16.mxu0 0
        %595 = vmatpush1.bf16.msra.mxu0 0
        %596 = vmatprep.mubr.bf16.mxu0 0
        %597 = vmatmul.mubr.bf16.gmra.mrb[0].mxu0 %v521
        %v598 = vpop.f32.mrb[0].mxu0
        %v599 = vadd.f32 %v518, %v598
        %v600 = vpop.f32.mrb[0].mxu0
        %v601 = vadd.f32 %v518, %v600
        %v602 = vpop.f32.mrb[0].mxu0
        %v603 = vpop.f32.mrb[0].mxu0
        %604 = vdwg.mxu0
        %605 = vmatprep.subr.bf16.mxu0 %v510
        %606 = vmatpush1.bf16.msra.mxu0 %v509
        %607 = vmatprep.subr.bf16.mxu0 0
        %608 = vmatpush1.bf16.msra.mxu0 0
        %609 = vmatprep.subr.bf16.mxu0 0
        %610 = vmatpush1.bf16.msra.mxu0 0
        %611 = vmatprep.subr.bf16.mxu0 0
        %612 = vmatpush1.bf16.msra.mxu0 0
        %613 = vmatprep.subr.bf16.mxu0 0
        %614 = vmatpush1.bf16.msra.mxu0 0
        %615 = vmatprep.subr.bf16.mxu0 0
        %616 = vmatpush1.bf16.msra.mxu0 0
        %617 = vmatprep.subr.bf16.mxu0 0
        %618 = vmatpush1.bf16.msra.mxu0 0
        %619 = vmatprep.subr.bf16.mxu0 0
        %620 = vmatpush1.bf16.msra.mxu0 0
        %621 = vmatprep.subr.bf16.mxu0 0
        %622 = vmatpush1.bf16.msra.mxu0 0
        %623 = vmatprep.subr.bf16.mxu0 0
        %624 = vmatpush1.bf16.msra.mxu0 0
        %625 = vmatprep.subr.bf16.mxu0 0
        %626 = vmatpush1.bf16.msra.mxu0 0
        %627 = vmatprep.subr.bf16.mxu0 0
        %628 = vmatpush1.bf16.msra.mxu0 0
        %629 = vmatprep.subr.bf16.mxu0 0
        %630 = vmatpush1.bf16.msra.mxu0 0
        %631 = vmatprep.subr.bf16.mxu0 0
        %632 = vmatpush1.bf16.msra.mxu0 0
        %633 = vmatprep.subr.bf16.mxu0 0
        %634 = vmatpush1.bf16.msra.mxu0 0
        %635 = vmatprep.subr.bf16.mxu0 0
        %636 = vmatpush1.bf16.msra.mxu0 0
        %637 = vmatprep.mubr.bf16.mxu0 0
        %638 = vmatmul.mubr.bf16.gmra.mrb[0].mxu0 %v521
        %v639 = vpop.f32.mrb[0].mxu0
        %v640 = vadd.f32 %v518, %v639
        %v641 = vpop.f32.mrb[0].mxu0
        %v642 = vadd.f32 %v518, %v641
        %v643 = vpop.f32.mrb[0].mxu0
        %v644 = vpop.f32.mrb[0].mxu0
        %645 = vdwg.mxu0
        %646 = vmatprep.subr.bf16.mxu0 %v512
        %647 = vmatpush1.bf16.msra.mxu0 %v511
        %648 = vmatprep.subr.bf16.mxu0 0
        %649 = vmatpush1.bf16.msra.mxu0 0
        %650 = vmatprep.subr.bf16.mxu0 0
        %651 = vmatpush1.bf16.msra.mxu0 0
        %652 = vmatprep.subr.bf16.mxu0 0
        %653 = vmatpush1.bf16.msra.mxu0 0
        %654 = vmatprep.subr.bf16.mxu0 0
        %655 = vmatpush1.bf16.msra.mxu0 0
        %656 = vmatprep.subr.bf16.mxu0 0
        %657 = vmatpush1.bf16.msra.mxu0 0
        %658 = vmatprep.subr.bf16.mxu0 0
        %659 = vmatpush1.bf16.msra.mxu0 0
        %660 = vmatprep.subr.bf16.mxu0 0
        %661 = vmatpush1.bf16.msra.mxu0 0
        %662 = vmatprep.subr.bf16.mxu0 0
        %663 = vmatpush1.bf16.msra.mxu0 0
        %664 = vmatprep.subr.bf16.mxu0 0
        %665 = vmatpush1.bf16.msra.mxu0 0
        %666 = vmatprep.subr.bf16.mxu0 0
        %667 = vmatpush1.bf16.msra.mxu0 0
        %668 = vmatprep.subr.bf16.mxu0 0
        %669 = vmatpush1.bf16.msra.mxu0 0
        %670 = vmatprep.subr.bf16.mxu0 0
        %671 = vmatpush1.bf16.msra.mxu0 0
        %672 = vmatprep.subr.bf16.mxu0 0
        %673 = vmatpush1.bf16.msra.mxu0 0
        %674 = vmatprep.subr.bf16.mxu0 0
        %675 = vmatpush1.bf16.msra.mxu0 0
        %676 = vmatprep.subr.bf16.mxu0 0
        %677 = vmatpush1.bf16.msra.mxu0 0
        %678 = vmatprep.mubr.bf16.mxu0 0
        %679 = vmatmul.mubr.bf16.gmra.mrb[0].mxu0 %v521
        %v680 = vpop.f32.mrb[0].mxu0
        %v681 = vadd.f32 %v518, %v680
        %v682 = vpop.f32.mrb[0].mxu0
        %v683 = vadd.f32 %v518, %v682
        %v684 = vpop.f32.mrb[0].mxu0
        %v685 = vpop.f32.mrb[0].mxu0
        %686 = vdwg.mxu0
        %v687 = vpack.c.bf16 %v558, %v558
        %v688 = vpack.c.bf16 %v560, %v560
        %v689 = vpack.c.bf16 %v599, %v599
        %v690 = vpack.c.bf16 %v601, %v601
        %v691 = vpack.c.bf16 %v640, %v640
        %v692 = vpack.c.bf16 %v642, %v642
        %v693 = vpack.c.bf16 %v681, %v681
        %v694 = vpack.c.bf16 %v683, %v683
        %v703 = vunpack.c.l.b16 %v687
        %v704 = vunpack.c.l.b16 %v688
        %v705 = vunpack.c.l.b16 %v689
        %v706 = vunpack.c.l.b16 %v690
        %v707 = vunpack.c.l.b16 %v691
        %v708 = vunpack.c.l.b16 %v692
        %v709 = vunpack.c.l.b16 %v693
        %v710 = vunpack.c.l.b16 %v694
        %v711 = vpack.c.b16 %v704, %v703
        %v712 = vpack.c.b16 %v706, %v705
        %v713 = vpack.c.b16 %v708, %v707
        %v714 = vpack.c.b16 %v710, %v709
        %719 = vst [vmem:[%s242] sm:$0xff] %v711
        %720 = vst [vmem:[%s242 + $0x8] sm:$0xff] %v712
        %721 = vst [vmem:[%s242 + $0x10] sm:$0xff] %v713
        %722 = vst [vmem:[%s242 + $0x18] sm:$0xff] %v714
        %s723 = sand.u32 %s140, 1
        %s724 = scalar_lea.sflag [#allocation4], %s723
        %s725 = sand.u32 %s140, 1
        %s726 = smul.addr %s725, 32
        %s727 = scalar_lea.vmem [#allocation5], %s726
        // Predicated region
        $region45: #{tpu_custom_call.1} parent=39 // pred_check
          %p728 = pneg %p150
        $region46: #{tpu_custom_call.1} parent=39 // pred_check_branch
          %730 = sbr.rel (%p728) target = $region48
        $region47: #{tpu_custom_call.1} parent=39 // pred_region
          %s731 = smul.u32 8, %s22
          %s733 = ssub.s32 512, 512
          %734 = vsyncadd %s724, %s733
          %s735 = smul.addr %s731, 64
          %s736 = scalar_lea.hbm %s5, %s735
          %s738 = sshll.u32 %s727, 4
          %s739 = int_to_ptr.vmem [resolvable:$true] %s738
          %741 = dma.vmem_to_hbm [thread:$0]  %s739, 512, %s736, %s724
        $region48: #{tpu_custom_call.1} parent=39 // pred_fallthru
          _
      $region40: #{tpu_custom_call.1} parent=5 // pred_fallthru
        _
      %p742 = scmp.le.s32.totalorder 2, %s17
      // Predicated region
      $region49: #{tpu_custom_call.1} parent=5 // pred_check
        %p743 = pneg %p742
      $region50: #{tpu_custom_call.1} parent=5 // pred_check_branch
        %745 = sbr.rel (%p743) target = $region52
      $region51: #{tpu_custom_call.1} parent=5 // pred_region
        %s746 = ssub.s32 %s17, 2
        // Predicated region
        $region53: #{tpu_custom_call.1} parent=51 // pred_check
          %p747 = pneg %p156
        $region54: #{tpu_custom_call.1} parent=51 // pred_check_branch
          %749 = sbr.rel (%p747) target = $region56
        $region55: #{tpu_custom_call.1} parent=51 // pred_region
          %s750 = sand.u32 %s141, 1
          %s751 = scalar_lea.sflag [#allocation4], %s750
          %s752 = sand.u32 %s141, 1
          %s753 = smul.addr %s752, 32
          %s754 = scalar_lea.vmem [#allocation5], %s753
          %755 = dma.done %s751, 512
        $region56: #{tpu_custom_call.1} parent=51 // pred_fallthru
          _
      $region52: #{tpu_custom_call.1} parent=5 // pred_fallthru
        _
    $region6: #{tpu_custom_call.1} parent=1 // loop_footer
      %s21 = sadd.s32 1, %s17
    $region7: #{tpu_custom_call.1} parent=1 // loop_footer_branch
      %16 = sbr.rel target = $region3
    $region8: #{tpu_custom_call.1} parent=1 // loop_exit
      _
    %756 = vsyncpa [#allocation3], 1
    %s757 = scalar_lea.sflag [#allocation3], 1
    %758 = vsyncpa %s757, 1
    %759 = vsyncpa [#allocation4], 1
    %s760 = scalar_lea.sflag [#allocation4], 1
    %761 = vsyncpa %s760, 1

</llo_original>
